<compile_context>
chip_gen: v7x
topology: tpu7x:2x2x1
jax: 0.10.0
libtpu: 0.0.40
codegen_flags: <defaults>
</compile_context>

<pallas_src>
import functools

import jax
import jax.numpy as jnp
from jax import lax
from jax.experimental import pallas as pl
from jax.experimental.pallas import tpu as pltpu


def _convblock_kernel(p_ref, w_ref, pb_ref, o_ref):
    # p_ref:  (1, GK, TS)    lane-dense im2col patch tile (all groups stacked along GK)
    # w_ref:  (out_c, GK)    block-diagonal conv weight with BN scale already folded in
    # pb_ref: (2, out_c, 1)  [0] = folded BN bias, [1] = PReLU per-channel slope
    # o_ref:  (1, out_c, TS)
    p = p_ref[0]                                              # (GK, TS)
    w = w_ref[...]                                            # (out_c, GK)
    y = jnp.dot(w, p, preferred_element_type=jnp.float32)     # MXU matmul -> (out_c, TS) f32
    bias = pb_ref[0]                                          # (out_c, 1), broadcasts on lanes
    alpha = pb_ref[1]                                         # (out_c, 1)
    y = y + bias                                              # fused BatchNorm (scale in W)
    y = jnp.where(y > 0, y, alpha * y)                        # PReLU
    o_ref[0] = y.astype(o_ref.dtype)


def conv_block_forward(x, weight, bn_gamma, bn_beta, bn_mean, bn_var, prelu_alpha,
                       *, stride=(1, 1), padding=(0, 0), groups=1, eps=1e-5,
                       block_s=512, compute_dtype=jnp.float32):
    """ConvBlock forward.  x: (N, Cin, H, W) float32 (NCHW, like PyTorch).

    block_s: lane-tile size over the spatial dim (multiple of 128).
    compute_dtype: dtype of patches/weights fed to the MXU (f32 default; bf16 halves
                   HBM traffic for the dominant patches stream, accumulation stays f32).
    """
    N, Cin, H, W = x.shape
    out_c, cin_g, KH, KW = weight.shape
    G = groups
    assert Cin == cin_g * G and out_c % G == 0
    cout_g = out_c // G
    sh, sw = stride
    ph, pw = padding
    OH = (H + 2 * ph - KH) // sh + 1
    OW = (W + 2 * pw - KW) // sw + 1
    K = cin_g * KH * KW
    GK = G * K
    S = OH * OW

    # ---- im2col emitted directly in lane-dense (N, GK, S) layout ----------------
    # GK ordering is (g, cin_g, kh, kw), matching the block-diagonal weight flatten.
    x_pad = jnp.pad(x, ((0, 0), (0, 0), (ph, ph), (pw, pw)))
    cols = []
    for kh in range(KH):
        for kw in range(KW):
            sl = x_pad[:, :, kh:kh + (OH - 1) * sh + 1:sh, kw:kw + (OW - 1) * sw + 1:sw]
            cols.append(sl)                                   # (N, Cin, OH, OW)
    patches = jnp.stack(cols, axis=2)                         # (N, Cin, KH*KW, OH, OW)
    patches = patches.reshape(N, GK, S)                       # no transpose needed

    # ---- fold BN (eval) into the weights; build block-diagonal (out_c, GK) ------
    scale = bn_gamma / jnp.sqrt(bn_var + eps)                 # (out_c,)
    bias = bn_beta - bn_mean * scale                          # (out_c,)
    w_flat = weight.reshape(G, cout_g, K) * scale.reshape(G, cout_g, 1)
    eye = jnp.eye(G, dtype=w_flat.dtype)
    w_bd = jnp.einsum("gok,gh->gohk", w_flat, eye).reshape(out_c, GK)

    params = jnp.stack([bias, prelu_alpha], axis=0).reshape(2, out_c, 1).astype(jnp.float32)

    patches = patches.astype(compute_dtype)
    w_bd = w_bd.astype(compute_dtype)

    # ---- tile the spatial (lane) dim; pad to a multiple of the tile -------------
    s_pad128 = ((S + 127) // 128) * 128
    ts = min(block_s, s_pad128)                               # multiple of 128
    S_pad = ((S + ts - 1) // ts) * ts
    if S_pad != S:
        patches = jnp.pad(patches, ((0, 0), (0, 0), (0, S_pad - S)))
    n_s = S_pad // ts

    flops = 2 * N * S * GK * out_c
    bytes_accessed = (patches.size * patches.dtype.itemsize
                      + w_bd.size * w_bd.dtype.itemsize
                      + params.size * 4
                      + N * out_c * S_pad * 4)

    out = pl.pallas_call(
        _convblock_kernel,
        out_shape=jax.ShapeDtypeStruct((N, out_c, S_pad), jnp.float32),
        grid_spec=pltpu.PrefetchScalarGridSpec(
            num_scalar_prefetch=0,
            grid=(N, n_s),
            in_specs=[
                pl.BlockSpec((1, GK, ts), lambda n, s: (n, 0, s)),
                pl.BlockSpec((out_c, GK), lambda n, s: (0, 0)),
                pl.BlockSpec((2, out_c, 1), lambda n, s: (0, 0, 0)),
            ],
            out_specs=pl.BlockSpec((1, out_c, ts), lambda n, s: (n, 0, s)),
        ),
        compiler_params=pltpu.CompilerParams(
            dimension_semantics=("parallel", "parallel"),
            vmem_limit_bytes=32 * 1024 * 1024,
        ),
        cost_estimate=pl.CostEstimate(
            flops=flops, transcendentals=0, bytes_accessed=bytes_accessed),
    )(patches, w_bd, params)

    # (N, out_c, S_pad) -> (N, out_c, OH, OW): slice the spatial padding, no transpose.
    return out[:, :, :S].reshape(N, out_c, OH, OW)


def _reference(x, weight, bn_gamma, bn_beta, bn_mean, bn_var, prelu_alpha,
               *, stride, padding, groups, eps=1e-5):
    y = lax.conv_general_dilated(
        x, weight, window_strides=stride,
        padding=[(padding[0], padding[0]), (padding[1], padding[1])],
        dimension_numbers=("NCHW", "OIHW", "NCHW"),
        feature_group_count=groups)
    scale = (bn_gamma / jnp.sqrt(bn_var + eps))[None, :, None, None]
    bias = (bn_beta - bn_mean * bn_gamma / jnp.sqrt(bn_var + eps))[None, :, None, None]
    y = y * scale + bias
    a = prelu_alpha[None, :, None, None]
    return jnp.where(y > 0, y, a * y)


if __name__ == "__main__":
    # ConvBlock(in_c=4, out_c=8, kernel=(3,3), stride=(1,1), padding=(1,1), groups=2)
    N, Cin, H, W = 2, 4, 16, 16
    out_c, kernel, stride, padding, groups = 8, (3, 3), (1, 1), (1, 1), 2
    cin_g = Cin // groups

    key = jax.random.PRNGKey(0)
    k_x, k_w, k_g, k_b, k_m, k_v = jax.random.split(key, 6)
    x = jax.random.normal(k_x, (N, Cin, H, W), jnp.float32)
    weight = jax.random.normal(k_w, (out_c, cin_g, *kernel), jnp.float32) * 0.1
    bn_gamma = 1.0 + 0.1 * jax.random.normal(k_g, (out_c,), jnp.float32)
    bn_beta = 0.1 * jax.random.normal(k_b, (out_c,), jnp.float32)
    bn_mean = 0.1 * jax.random.normal(k_m, (out_c,), jnp.float32)
    bn_var = jnp.abs(jax.random.normal(k_v, (out_c,), jnp.float32)) + 0.5
    prelu_alpha = jnp.full((out_c,), 0.25, jnp.float32)   # PyTorch PReLU default

    fwd = jax.jit(functools.partial(conv_block_forward,
                                    stride=stride, padding=padding, groups=groups))
    out = fwd(x, weight, bn_gamma, bn_beta, bn_mean, bn_var, prelu_alpha)
    jax.block_until_ready(out)

    ref = _reference(x, weight, bn_gamma, bn_beta, bn_mean, bn_var, prelu_alpha,
                     stride=stride, padding=padding, groups=groups)
    assert out.shape == (N, out_c, H, W)
    assert jnp.allclose(out, ref, atol=1e-4, rtol=1e-4), "mismatch vs reference"
    print("KERNEL_OK")
</pallas_src>

<mosaic_0001>
module attributes {stable_mosaic.version = 11 : i64} {
  func.func @_convblock_kernel(%arg0: i32, %arg1: i32, %arg2: memref<1x36x256xf32, #tpu.memory_space<vmem>>, %arg3: memref<8x36xf32, #tpu.memory_space<vmem>>, %arg4: memref<2x8x1xf32, #tpu.memory_space<vmem>>, %arg5: memref<1x8x256xf32, #tpu.memory_space<vmem>>) attributes {dimension_semantics = [#tpu.dimension_semantics<parallel>, #tpu.dimension_semantics<parallel>], iteration_bounds = array<i64: 2, 1>, scalar_prefetch = 0 : i64, scratch_operands = 0 : i64, tpu.core_type = #tpu.core_type<tc>, window_params = [{transform_indices = @transform_0, window_bounds = array<i64: 1, 36, 256>}, {pipeline_mode = #tpu.pipeline_mode<synchronous>, transform_indices = @transform_1, window_bounds = array<i64: 8, 36>}, {pipeline_mode = #tpu.pipeline_mode<synchronous>, transform_indices = @transform_2, window_bounds = array<i64: 2, 8, 1>}, {transform_indices = @transform_3, window_bounds = array<i64: 1, 8, 256>}]} {
    %c0 = arith.constant 0 : index
    %c0_0 = arith.constant 0 : index
    %c0_1 = arith.constant 0 : index
    %0 = vector.load %arg2[%c0, %c0_0, %c0_1] : memref<1x36x256xf32, #tpu.memory_space<vmem>>, vector<1x36x256xf32>
    %1 = vector.shape_cast %0 : vector<1x36x256xf32> to vector<36x256xf32>
    %c0_2 = arith.constant 0 : index
    %c0_3 = arith.constant 0 : index
    %2 = vector.load %arg3[%c0_2, %c0_3] : memref<8x36xf32, #tpu.memory_space<vmem>>, vector<8x36xf32>
    %cst = arith.constant dense<0.000000e+00> : vector<8x256xf32>
    %3 = tpu.matmul %2, %1, %cst {dimension_numbers = #tpu.dot_dimension_numbers<[1], [0], [0], [1], [0, 0, 1, 1], [], []>} : vector<8x36xf32>, vector<36x256xf32>, vector<8x256xf32> -> vector<8x256xf32>
    %c0_4 = arith.constant 0 : index
    %c0_5 = arith.constant 0 : index
    %c0_6 = arith.constant 0 : index
    %4 = vector.load %arg4[%c0_4, %c0_5, %c0_6] : memref<2x8x1xf32, #tpu.memory_space<vmem>>, vector<1x8x1xf32>
    %5 = vector.shape_cast %4 : vector<1x8x1xf32> to vector<8x1xf32>
    %c1 = arith.constant 1 : index
    %c0_7 = arith.constant 0 : index
    %c0_8 = arith.constant 0 : index
    %6 = vector.load %arg4[%c1, %c0_7, %c0_8] : memref<2x8x1xf32, #tpu.memory_space<vmem>>, vector<1x8x1xf32>
    %7 = vector.shape_cast %6 : vector<1x8x1xf32> to vector<8x1xf32>
    %8 = vector.broadcast %5 : vector<8x1xf32> to vector<8x256xf32>
    %9 = arith.addf %3, %8 : vector<8x256xf32>
    %cst_9 = arith.constant 0.000000e+00 : f32
    %10 = vector.broadcast %cst_9 : f32 to vector<8x256xf32>
    %11 = arith.cmpf ogt, %9, %10 : vector<8x256xf32>
    %12 = vector.broadcast %7 : vector<8x1xf32> to vector<8x256xf32>
    %13 = arith.mulf %12, %9 : vector<8x256xf32>
    %14 = arith.select %11, %9, %13 : vector<8x256xi1>, vector<8x256xf32>
    %c0_10 = arith.constant 0 : index
    %c0_11 = arith.constant 0 : index
    %c0_12 = arith.constant 0 : index
    %15 = vector.load %arg5[%c0_10, %c0_11, %c0_12] : memref<1x8x256xf32, #tpu.memory_space<vmem>>, vector<1x8x256xf32>
    %16 = vector.shape_cast %15 : vector<1x8x256xf32> to vector<8x256xf32>
    %17 = vector.shape_cast %14 : vector<8x256xf32> to vector<1x8x256xf32>
    tpu.vector_store %arg5[%c0_10, %c0_11, %c0_12], %17 {strides = array<i32>} : memref<1x8x256xf32, #tpu.memory_space<vmem>>, vector<1x8x256xf32>,
    return
  }
  func.func @transform_0(%arg0: i32, %arg1: i32) -> (i32, i32, i32) {
    %c0_i32 = arith.constant 0 : i32
    %c0_i32_0 = arith.constant 0 : i32
    return %arg0, %c0_i32, %arg1 : i32, i32, i32
  }
  func.func @transform_1(%arg0: i32, %arg1: i32) -> (i32, i32) {
    %c0_i32 = arith.constant 0 : i32
    %c0_i32_0 = arith.constant 0 : i32
    %c0_i32_1 = arith.constant 0 : i32
    return %c0_i32, %c0_i32_0 : i32, i32
  }
  func.func @transform_2(%arg0: i32, %arg1: i32) -> (i32, i32, i32) {
    %c0_i32 = arith.constant 0 : i32
    %c0_i32_0 = arith.constant 0 : i32
    %c0_i32_1 = arith.constant 0 : i32
    %c0_i32_2 = arith.constant 0 : i32
    return %c0_i32, %c0_i32_0, %c0_i32_1 : i32, i32, i32
  }
  func.func @transform_3(%arg0: i32, %arg1: i32) -> (i32, i32, i32) {
    %c0_i32 = arith.constant 0 : i32
    %c0_i32_0 = arith.constant 0 : i32
    return %arg0, %c0_i32, %arg1 : i32, i32, i32
  }
}

</mosaic_0001>

<llo_original>
// kernel: mul.7
$region0: #{mul.7}
  %s0 = inlined_call_operand.vmem [shape: f32[8], index: 0, kind: input, shape index: {}]
  %s1 = inlined_call_operand.vmem [shape: f32[2,4], index: 1, kind: output, shape index: {}]
  $region1: #{mul.7} parent=0
    #allocation0 [shape = 'u8[4096]{0}', space=vmem, size = 0x1000, scoped, tag = 'scoped mem for output reshape']
    #allocation1 [shape = 'u8[4096]{0}', space=vmem, size = 0x1000, scoped, tag = 'scoped mem for input reshape']
    %s3 = sshllo.u32 0, 1
    %v4 = vld [vmem:[%s0] sm:%s3]
    %5 = vst [vmem:[#allocation1] sm:%s3] %v4
    %v6 = vld [vmem:[#allocation1] sm:$0x1]
    %vm7 = vcmask 31744
    %8 = vst.msk [vmem:[#allocation0] sm:$0x1] %vm7, %v6
    %v9 = vld [vmem:[#allocation1] sm:$0x1]
    %10 = vrot.lane.b32.xlu0 %v9, 124
    %v11 = vpop.permute.xlu0 %10
    %vm12 = vcmask 31744
    %s13 = scalar_lea.vmem [#allocation0], 1
    %14 = vst.msk [vmem:[%s13] sm:$0x1] %vm12, %v11
    %s16 = sshllo.u32 0, 2
    %v18 = vld [vmem:[#allocation0] sm:%s16]
    %s19 = sshllo.u32 0, 2
    %20 = vst [vmem:[%s1] sm:%s19] %v18

// kernel: conv_block_forward.1
$region0: #{conv_block_forward.1}
  #allocation0 [shape = 'u32[]', space=smem, size = 0x4, offset = 0x4, fixed_abs, tag = 'smem constant byte address 0x4 - core index']
  #allocation1 [shape = 'u32[144,128]{1,0:T(1,128)}', space=vmem, size = 0x12000, scoped, tag = 'internal scratch']
  %s0 = inlined_call_operand.vmem [shape: f32[2,36,256], index: 0, kind: input, shape index: {}]
  %s1 = inlined_call_operand.vmem [shape: f32[8,36], index: 1, kind: input, shape index: {}]
  %s2 = inlined_call_operand.vmem [shape: f32[2,8,1], index: 2, kind: input, shape index: {}]
  %s3 = inlined_call_operand.vmem [shape: f32[2,8,256], index: 3, kind: output, shape index: {}]
  %s4 = sld [smem:[#allocation0]]
  $region45: #{conv_block_forward.1} parent=0
    _
  %s6 = ssub.s32 1, %s4
  %s7 = scalar_select 0, %s6, %s4
  loop: start=0, step=1, limit=4
  $region2: #{conv_block_forward.1} parent=0 // loop_pre_header
    _
  $region3: #{conv_block_forward.1} parent=0 // loop_header
    %s9 = sphi 0, %s13
    %p10 = scmp.ge.s32.totalorder %s9, 4
    %s16 = sphi 0, %s28
    %s17 = sphi 0, %s24
    %s18 = sphi 0, %s16
    %s19 = sphi 0, %s17
    %s20 = sphi 0, %s18
    %s21 = sphi 0, %s19
    %s33 = sphi 0, %s35
    %s36 = sphi 0, %s33
    %s37 = sphi 0, %s36
    %s53 = sphi 0, %s37
    %s57 = sphi 0, %s57
    %s59 = sphi 0, %s57
    %s60 = sphi 0, %s59
    %s74 = sphi 0, %s60
    %s78 = sphi 0, %s78
    %s80 = sphi 0, %s78
    %s81 = sphi 0, %s80
    %s95 = sphi 0, %s81
    %s103 = sphi 0, %s105
    %s106 = sphi 0, %s103
    %s107 = sphi 0, %s106
    %s123 = sphi 0, %s107
  $region4: #{conv_block_forward.1} parent=0 // loop_header_branch
    %12 = sbr.rel (%p10) target = $region8
  $region5: #{conv_block_forward.1} parent=0 // loop_body
    %s14 = ssub.s32 %s9, 1
    %s15 = ssub.s32 %s9, 2
    %s22 = sadd.s32 1, %s17
    %p23 = scmp.ge.s32.totalorder %s22, 1
    %s24 = scalar_select %p23, 0, %s22
    %s25 = sadd.s32 1, %s16
    %s26 = scalar_select %p23, %s25, %s16
    %p27 = scmp.ge.s32.totalorder %s26, 2
    %s28 = scalar_select %p27, 0, %s26
    %s29 = ssub.s32 %s16, %s28
    %s30 = ssub.s32 %s17, %s24
    %s31 = sor.u32 %s29, %s30
    %p32 = scmp.eq.s32.totalorder %s31, 0
    %s34 = sadd.s32 %s33, 1
    %s35 = scalar_select %p32, %s33, %s34
    %p38 = pneg %p32
    %p39 = scmp.eq.s32.totalorder %s9, 1
    %p40 = por %p38, %p39
    %p41 = scmp.ne.s32.totalorder %s33, %s36
    %p42 = scmp.eq.s32.totalorder %s9, 0
    %p43 = por %p41, %p42
    %p44 = scmp.ne.s32.totalorder %s33, %s36
    %p45 = scmp.eq.s32.totalorder %s14, 1
    %p46 = por %p44, %p45
    %p47 = scmp.ne.s32.totalorder %s36, %s37
    %p48 = scmp.eq.s32.totalorder %s14, 0
    %p49 = por %p47, %p48
    %p50 = scmp.ne.s32.totalorder %s36, %s37
    %p51 = scmp.eq.s32.totalorder %s15, 1
    %p52 = por %p50, %p51
    %p54 = scmp.ne.s32.totalorder %s37, %s53
    %p55 = scmp.eq.s32.totalorder %s15, 0
    %p56 = por %p54, %p55
    %s58 = sadd.s32 %s57, 1
    %p61 = scmp.eq.s32.totalorder %s9, 1
    %p62 = scmp.ne.s32.totalorder %s57, %s59
    %p63 = scmp.eq.s32.totalorder %s9, 0
    %p64 = por %p62, %p63
    %p65 = scmp.ne.s32.totalorder %s57, %s59
    %p66 = scmp.eq.s32.totalorder %s14, 1
    %p67 = por %p65, %p66
    %p68 = scmp.ne.s32.totalorder %s59, %s60
    %p69 = scmp.eq.s32.totalorder %s14, 0
    %p70 = por %p68, %p69
    %p71 = scmp.ne.s32.totalorder %s59, %s60
    %p72 = scmp.eq.s32.totalorder %s15, 1
    %p73 = por %p71, %p72
    %p75 = scmp.ne.s32.totalorder %s60, %s74
    %p76 = scmp.eq.s32.totalorder %s15, 0
    %p77 = por %p75, %p76
    %s79 = sadd.s32 %s78, 1
    %p82 = scmp.eq.s32.totalorder %s9, 1
    %p83 = scmp.ne.s32.totalorder %s78, %s80
    %p84 = scmp.eq.s32.totalorder %s9, 0
    %p85 = por %p83, %p84
    %p86 = scmp.ne.s32.totalorder %s78, %s80
    %p87 = scmp.eq.s32.totalorder %s14, 1
    %p88 = por %p86, %p87
    %p89 = scmp.ne.s32.totalorder %s80, %s81
    %p90 = scmp.eq.s32.totalorder %s14, 0
    %p91 = por %p89, %p90
    %p92 = scmp.ne.s32.totalorder %s80, %s81
    %p93 = scmp.eq.s32.totalorder %s15, 1
    %p94 = por %p92, %p93
    %p96 = scmp.ne.s32.totalorder %s81, %s95
    %p97 = scmp.eq.s32.totalorder %s15, 0
    %p98 = por %p96, %p97
    %s99 = ssub.s32 %s16, %s28
    %s100 = ssub.s32 %s17, %s24
    %s101 = sor.u32 %s99, %s100
    %p102 = scmp.eq.s32.totalorder %s101, 0
    %s104 = sadd.s32 %s103, 1
    %s105 = scalar_select %p102, %s103, %s104
    %p108 = pneg %p102
    %p109 = scmp.eq.s32.totalorder %s9, 1
    %p110 = por %p108, %p109
    %p111 = scmp.ne.s32.totalorder %s103, %s106
    %p112 = scmp.eq.s32.totalorder %s9, 0
    %p113 = por %p111, %p112
    %p114 = scmp.ne.s32.totalorder %s103, %s106
    %p115 = scmp.eq.s32.totalorder %s14, 1
    %p116 = por %p114, %p115
    %p117 = scmp.ne.s32.totalorder %s106, %s107
    %p118 = scmp.eq.s32.totalorder %s14, 0
    %p119 = por %p117, %p118
    %p120 = scmp.ne.s32.totalorder %s106, %s107
    %p121 = scmp.eq.s32.totalorder %s15, 1
    %p122 = por %p120, %p121
    %p124 = scmp.ne.s32.totalorder %s107, %s123
    %p125 = scmp.eq.s32.totalorder %s15, 0
    %p126 = por %p124, %p125
    %p127 = scmp.le.s32.totalorder 1, %s9
    %p128 = scmp.lt.s32.totalorder %s9, 3
    %p129 = pnand %p127, %p128
    %p130 = pneg %p129
    // Predicated region
    $region9: #{conv_block_forward.1} parent=5 // pred_check
      _
    $region10: #{conv_block_forward.1} parent=5 // pred_check_branch
      %132 = sbr.rel (%p129) target = $region12
    $region11: #{conv_block_forward.1} parent=5 // pred_region
      %s133 = ssub.s32 %s9, 1
      // Predicated region
      $region13: #{conv_block_forward.1} parent=11 // pred_check
        %p134 = pneg %p70
      $region14: #{conv_block_forward.1} parent=11 // pred_check_branch
        %136 = sbr.rel (%p134) target = $region16
      $region15: #{conv_block_forward.1} parent=11 // pred_region
        _
      $region16: #{conv_block_forward.1} parent=11 // pred_fallthru
        _
      // Predicated region
      $region17: #{conv_block_forward.1} parent=11 // pred_check
        %p137 = pneg %p91
      $region18: #{conv_block_forward.1} parent=11 // pred_check_branch
        %139 = sbr.rel (%p137) target = $region20
      $region19: #{conv_block_forward.1} parent=11 // pred_region
        _
      $region20: #{conv_block_forward.1} parent=11 // pred_fallthru
        _
    $region12: #{conv_block_forward.1} parent=5 // pred_fallthru
      _
    %p140 = scmp.lt.s32.totalorder %s9, 2
    // Predicated region
    $region21: #{conv_block_forward.1} parent=5 // pred_check
      %p141 = pneg %p140
    $region22: #{conv_block_forward.1} parent=5 // pred_check_branch
      %143 = sbr.rel (%p141) target = $region24
    $region23: #{conv_block_forward.1} parent=5 // pred_region
      // Predicated region
      $region25: #{conv_block_forward.1} parent=23 // pred_check
        %p144 = pneg %p43
      $region26: #{conv_block_forward.1} parent=23 // pred_check_branch
        %146 = sbr.rel (%p144) target = $region28
      $region27: #{conv_block_forward.1} parent=23 // pred_region
        %s147 = smul.u32 2, %s17
        %p148 = scmp.lt.s32.totalorder %s16, 1
        %s149 = scalar_select %p148, %s16, 1
        %p150 = scmp.lt.s32.totalorder %s147, 1
        %s151 = scalar_select %p150, %s147, 1
        %s152 = smul.addr %s149, 10
        %s153 = sadd.s32 %s151, %s152
        %s154 = smul.addr %s153, 8
        %s155 = scalar_lea.vmem %s0, %s154
        %s156 = smul.u32 2, %s17
      $region28: #{conv_block_forward.1} parent=23 // pred_fallthru
        _
    $region24: #{conv_block_forward.1} parent=5 // pred_fallthru
      _
    %p157 = scmp.le.s32.totalorder 1, %s9
    %p158 = scmp.lt.s32.totalorder %s9, 3
    %p159 = pnand %p157, %p158
    %p160 = pneg %p159
    // Predicated region
    $region29: #{conv_block_forward.1} parent=5 // pred_check
      _
    $region30: #{conv_block_forward.1} parent=5 // pred_check_branch
      %162 = sbr.rel (%p159) target = $region32
    $region31: #{conv_block_forward.1} parent=5 // pred_region
      %s163 = ssub.s32 %s9, 1
      %s164 = smul.u32 2, %s19
      %p165 = scmp.lt.s32.totalorder %s18, 1
      %s166 = scalar_select %p165, %s18, 1
      %p167 = scmp.lt.s32.totalorder %s164, 1
      %s168 = scalar_select %p167, %s164, 1
      %s169 = smul.addr %s166, 10
      %s170 = sadd.s32 %s168, %s169
      %s171 = smul.addr %s170, 8
      %s172 = scalar_lea.vmem %s0, %s171
      %p173 = pneg %p49
      %p174 = pneg %p46
      %p175 = pneg %p70
      %p176 = pneg %p67
      %p177 = pneg %p91
      %p178 = pneg %p88
      %p179 = pneg %p119
      %p180 = pneg %p116
      %s181 = smul.u32 2, %s19
      %p182 = scmp.lt.s32.totalorder %s18, 1
      %s183 = scalar_select %p182, %s18, 1
      %p184 = scmp.lt.s32.totalorder %s181, 1
      %s185 = scalar_select %p184, %s181, 1
      %s186 = smul.addr %s183, 2
      %s187 = sadd.s32 %s185, %s186
      %s188 = smul.addr %s187, 8
      %s189 = scalar_lea.vmem %s3, %s188
      %s190 = smul.u32 2, %s19
      %p191 = scmp.lt.s32.totalorder %s18, 1
      %s192 = scalar_select %p191, %s18, 1
      %p193 = scmp.lt.s32.totalorder %s190, 1
      %s194 = scalar_select %p193, %s190, 1
      %s195 = smul.addr %s192, 10
      %s196 = sadd.s32 %s194, %s195
      %s197 = smul.addr %s196, 8
      %s198 = scalar_lea.vmem %s0, %s197
      %s199 = smul.u32 2, %s19
      %s200 = smul.u32 2, %s19
      %p201 = scmp.lt.s32.totalorder %s18, 1
      %s202 = scalar_select %p201, %s18, 1
      %p203 = scmp.lt.s32.totalorder %s200, 1
      %s204 = scalar_select %p203, %s200, 1
      %s205 = smul.addr %s202, 2
      %s206 = sadd.s32 %s204, %s205
      %s207 = smul.addr %s206, 8
      %s208 = scalar_lea.vmem %s3, %s207
      %s209 = smul.u32 2, %s19
      %v210 = vld [vmem:[%s198] sm:$0xff]
      %v211 = vld [vmem:[%s198 + $0x8] sm:$0xff]
      %v212 = vld [vmem:[%s198 + $0x10] sm:$0xff]
      %v213 = vld [vmem:[%s198 + $0x18] sm:$0xff]
      %v214 = vld [vmem:[%s198 + $0x20] sm:$0xff]
      %v215 = vld [vmem:[%s198 + $0x28] sm:$0xff]
      %v216 = vld [vmem:[%s198 + $0x30] sm:$0xff]
      %v217 = vld [vmem:[%s198 + $0x38] sm:$0xff]
      %v218 = vld [vmem:[%s198 + $0x40] sm:$0xf]
      %v219 = vld [vmem:[%s198 + $0x48] sm:$0xf]
      %v220 = vld [vmem:[%s1] sm:$0xff]
      %v221 = vld [vmem:[%s2] sm:$0xff]
      %s222 = scalar_lea.vmem %s2, 8
      %v223 = vld [vmem:[%s222] sm:$0xff]
      %225 = vset.pattern.permute.xlu0 0
      %226 = vperm.xlu0 %225, %v221
      %v227 = vpop.permute.xlu0 %226
      %vm229 = vcmask 293888
      %v231 = vsel %vm229, %v220, 0
      %vm233 = vcmask 1043456
      %v235 = vsel %vm233, %v218, 0
      %v238 = vsel %vm233, %v219, 0
      %240 = vmatprep.subr.mxu0 %v211
      %241 = vmatpush1.msra.mxu0 %v210
      %242 = vmatprep.subr.mxu0 %v213
      %243 = vmatpush1.msra.mxu0 %v212
      %244 = vmatprep.subr.mxu0 %v215
      %245 = vmatpush1.msra.mxu0 %v214
      %246 = vmatprep.subr.mxu0 %v217
      %247 = vmatpush1.msra.mxu0 %v216
      %248 = vmatprep.subr.mxu0 %v238
      %249 = vmatpush1.msra.mxu0 %v235
      %250 = vmatprep.subr.mxu0 0.0
      %251 = vmatpush1.msra.mxu0 0.0
      %252 = vmatprep.subr.mxu0 0.0
      %253 = vmatpush1.msra.mxu0 0.0
      %254 = vmatprep.subr.mxu0 0.0
      %255 = vmatpush1.msra.mxu0 0.0
      %256 = vmatprep.subr.mxu0 0.0
      %257 = vmatpush1.msra.mxu0 0.0
      %258 = vmatprep.subr.mxu0 0.0
      %259 = vmatpush1.msra.mxu0 0.0
      %260 = vmatprep.subr.mxu0 0.0
      %261 = vmatpush1.msra.mxu0 0.0
      %262 = vmatprep.subr.mxu0 0.0
      %263 = vmatpush1.msra.mxu0 0.0
      %264 = vmatprep.subr.mxu0 0.0
      %265 = vmatpush1.msra.mxu0 0.0
      %266 = vmatprep.subr.mxu0 0.0
      %267 = vmatpush1.msra.mxu0 0.0
      %268 = vmatprep.subr.mxu0 0.0
      %269 = vmatpush1.msra.mxu0 0.0
      %270 = vmatprep.subr.mxu0 0.0
      %271 = vmatpush1.msra.mxu0 0.0
      %272 = vmatprep.subr.mxu0 0.0
      %273 = vmatpush1.msra.mxu0 0.0
      %274 = vmatprep.subr.mxu0 0.0
      %275 = vmatpush1.msra.mxu0 0.0
      %276 = vmatprep.subr.mxu0 0.0
      %277 = vmatpush1.msra.mxu0 0.0
      %278 = vmatprep.subr.mxu0 0.0
      %279 = vmatpush1.msra.mxu0 0.0
      %280 = vmatprep.subr.mxu0 0.0
      %281 = vmatpush1.msra.mxu0 0.0
      %282 = vmatprep.subr.mxu0 0.0
      %283 = vmatpush1.msra.mxu0 0.0
      %284 = vmatprep.subr.mxu0 0.0
      %285 = vmatpush1.msra.mxu0 0.0
      %286 = vmatprep.subr.mxu0 0.0
      %287 = vmatpush1.msra.mxu0 0.0
      %288 = vmatprep.subr.mxu0 0.0
      %289 = vmatpush1.msra.mxu0 0.0
      %290 = vmatprep.subr.mxu0 0.0
      %291 = vmatpush1.msra.mxu0 0.0
      %292 = vmatprep.subr.mxu0 0.0
      %293 = vmatpush1.msra.mxu0 0.0
      %294 = vmatprep.subr.mxu0 0.0
      %295 = vmatpush1.msra.mxu0 0.0
      %296 = vmatprep.subr.mxu0 0.0
      %297 = vmatpush1.msra.mxu0 0.0
      %298 = vmatprep.subr.mxu0 0.0
      %299 = vmatpush1.msra.mxu0 0.0
      %300 = vmatprep.subr.mxu0 0.0
      %301 = vmatpush1.msra.mxu0 0.0
      %302 = vmatprep.subr.mxu0 0.0
      %303 = vmatpush1.msra.mxu0 0.0
      %304 = vmatprep.mubr.f32.mxu0 0.0
      %305 = vmatmul.mubr.f32.gmra.mrb[0].mxu0 %v231
      %v306 = vpop.f32.mrb[0].mxu0
      %v307 = vadd.f32 %v227, %v306
      %v308 = vpop.f32.mrb[0].mxu0
      %v309 = vadd.f32 %v227, %v308
      %310 = vdwg.mxu0
      %vm311 = vcmp.gt.f32.partialorder %v307, 0.0
      %vm312 = vcmp.gt.f32.partialorder %v309, 0.0
      %314 = vset.pattern.permute.xlu0 0
      %315 = vperm.xlu0 %314, %v223
      %v316 = vpop.permute.xlu0 %315
      %v318 = vmul.f32 %v316, %v307
      %v319 = vmul.f32 %v316, %v309
      %v320 = vsel %vm311, %v307, %v318
      %v321 = vsel %vm312, %v309, %v319
      %322 = vst [vmem:[%s208] sm:$0xff] %v320
      %323 = vst [vmem:[%s208 + $0x8] sm:$0xff] %v321
      %s324 = smul.u32 2, %s19
      %p325 = scmp.lt.s32.totalorder %s18, 1
      %s326 = scalar_select %p325, %s18, 1
      %p327 = scmp.lt.s32.totalorder %s324, 1
      %s328 = scalar_select %p327, %s324, 1
      %s329 = smul.addr %s326, 2
      %s330 = sadd.s32 %s328, %s329
      %s331 = smul.addr %s330, 8
      %s332 = scalar_lea.vmem %s3, %s331
      // Predicated region
      $region33: #{conv_block_forward.1} parent=31 // pred_check
        %p333 = pneg %p116
      $region34: #{conv_block_forward.1} parent=31 // pred_check_branch
        %335 = sbr.rel (%p333) target = $region36
      $region35: #{conv_block_forward.1} parent=31 // pred_region
        %s336 = smul.u32 2, %s19
      $region36: #{conv_block_forward.1} parent=31 // pred_fallthru
        _
    $region32: #{conv_block_forward.1} parent=5 // pred_fallthru
      _
    %p337 = scmp.le.s32.totalorder 2, %s9
    // Predicated region
    $region37: #{conv_block_forward.1} parent=5 // pred_check
      %p338 = pneg %p337
    $region38: #{conv_block_forward.1} parent=5 // pred_check_branch
      %340 = sbr.rel (%p338) target = $region40
    $region39: #{conv_block_forward.1} parent=5 // pred_region
      %s341 = ssub.s32 %s9, 2
      // Predicated region
      $region41: #{conv_block_forward.1} parent=39 // pred_check
        %p342 = pneg %p122
      $region42: #{conv_block_forward.1} parent=39 // pred_check_branch
        %344 = sbr.rel (%p342) target = $region44
      $region43: #{conv_block_forward.1} parent=39 // pred_region
        %s345 = smul.u32 2, %s21
        %p346 = scmp.lt.s32.totalorder %s20, 1
        %s347 = scalar_select %p346, %s20, 1
        %p348 = scmp.lt.s32.totalorder %s345, 1
        %s349 = scalar_select %p348, %s345, 1
        %s350 = smul.addr %s347, 2
        %s351 = sadd.s32 %s349, %s350
        %s352 = smul.addr %s351, 8
        %s353 = scalar_lea.vmem %s3, %s352
      $region44: #{conv_block_forward.1} parent=39 // pred_fallthru
        _
    $region40: #{conv_block_forward.1} parent=5 // pred_fallthru
      _
  $region6: #{conv_block_forward.1} parent=0 // loop_footer
    %s13 = sadd.s32 1, %s9
  $region7: #{conv_block_forward.1} parent=0 // loop_footer_branch
    %8 = sbr.rel target = $region3
  $region8: #{conv_block_forward.1} parent=0 // loop_exit
    _

</llo_original>
